<compile_context>
chip_gen: v7x
topology: tpu7x:2x2x1
jax: 0.10.0
libtpu: 0.0.40
codegen_flags: <defaults>
</compile_context>

<pallas_src>
import jax
import jax.numpy as jnp
from jax.experimental import pallas as pl
from jax.experimental.pallas import tpu as pltpu


def dynamics_mlp_fm_kernel(s_ref, a_ref, w1s_ref, w1a_ref, w2_ref, w3_ref,
                           b1_ref, b2_ref, b3_ref, out_ref):
    """One batch (lane) tile of DynamicsNN.forward, feature-major.

      s_ref : [S, tb]   a_ref : [A, tb]          (any float dtype; cast in-register)
      w1s   : [H, S]    w1a   : [H, A]           (compute dtype, VMEM-resident)
      w2    : [H, H]    w3    : [S, H]
      b1,b2 : [H, 1]    b3    : [S, 1]           (f32)
      out   : [S, tb]                            (lane-dense store)
    """
    cd = w1s_ref.dtype                      # compute dtype (bf16 or f32)
    s = s_ref[...].astype(cd)
    a = a_ref[...].astype(cd)

    # fc1 as a split matmul -> no concat anywhere.  f32 accumulation on the MXU.
    h1 = (jnp.dot(w1s_ref[...], s, preferred_element_type=jnp.float32)
          + jnp.dot(w1a_ref[...], a, preferred_element_type=jnp.float32)
          + b1_ref[...])
    h1 = jnp.maximum(h1, 0.0)

    h2 = jnp.dot(w2_ref[...], h1.astype(cd),
                 preferred_element_type=jnp.float32) + b2_ref[...]
    h2 = jnp.maximum(h2, 0.0)

    y = jnp.dot(w3_ref[...], h2.astype(cd),
                preferred_element_type=jnp.float32) + b3_ref[...]
    out_ref[...] = y.astype(out_ref.dtype)


def _pick_batch_tile(B, block_b, per_lane_bytes, vmem_budget_bytes=24 * 1024 * 1024):
    """Lane (=batch) tile: multiple of 128, VMEM-budgeted, >=2 grid steps when possible.

    per_lane_bytes is the estimated VMEM footprint per batch element (double-buffered
    in/out tiles + f32 h1/h2 live values).  The budget leaves headroom under the
    explicit 32 MiB vmem_limit_bytes so the same tile choice is safe on v5e/v6e/v7x.
    """
    if B <= 128:
        return B                           # single full-width block (lane dim == array dim)
    cap = min(block_b, vmem_budget_bytes // max(per_lane_bytes, 1))
    cap = max(128, (cap // 128) * 128)
    # Aim for >=2 grid steps so the "parallel" batch axis can shard over both v7x
    # TensorCores (harmless on single-TC v5e/v6e).
    half = max(128, (pl.cdiv(B, 2) // 128) * 128)
    return min(cap, half)


def dynamics_nn_forward_fm(state_fm, action_fm, kparams, *, block_b=4096,
                           out_dtype=jnp.float32):
    """Feature-major fast path.  state_fm: [S, B], action_fm: [A, B] -> [S, B].

    block_b: max batch-lane tile; worth sweeping 2048-8192 at large B (per-grid-step
    overhead ~0.35 us dominates for small tiles).  Set out_dtype=jnp.bfloat16 if the
    consumer tolerates it (cuts >half of the kernel's HBM write bytes).
    """
    S, B = state_fm.shape
    A, Ba = action_fm.shape
    assert Ba == B
    H = kparams["w2"].shape[0]
    assert kparams["w1s"].shape == (H, S)
    assert kparams["w1a"].shape == (H, A)
    assert kparams["w3"].shape == (S, H)

    r8 = lambda n: ((n + 7) // 8) * 8
    act_bytes = jnp.dtype(state_fm.dtype).itemsize
    out_bytes = jnp.dtype(out_dtype).itemsize
    per_lane = (2 * (r8(S) + r8(A)) * act_bytes     # s, a tiles (double-buffered)
                + 2 * r8(S) * out_bytes             # out tile (double-buffered)
                + 2 * H * 4                         # h1 / h2 f32 live values
                + 2 * r8(S) * 4)                    # f32 epilogue temporaries
    tb = _pick_batch_tile(B, block_b, per_lane)

    act_spec = lambda d: pl.BlockSpec((d, tb), lambda i: (0, i))
    const_spec = lambda shape: pl.BlockSpec(shape, lambda i: (0, 0))

    return pl.pallas_call(
        dynamics_mlp_fm_kernel,
        out_shape=jax.ShapeDtypeStruct((S, B), out_dtype),
        grid=(pl.cdiv(B, tb),),
        in_specs=[
            act_spec(S),                    # state  [S, B]  (batch on lanes)
            act_spec(A),                    # action [A, B]
            const_spec((H, S)),             # W1[:, :S]   -- VMEM-resident
            const_spec((H, A)),             # W1[:, S:]
            const_spec((H, H)),             # W2
            const_spec((S, H)),             # W3
            const_spec((H, 1)),             # b1
            const_spec((H, 1)),             # b2
            const_spec((S, 1)),             # b3
        ],
        out_specs=pl.BlockSpec((S, tb), lambda i: (0, i)),
        compiler_params=pltpu.CompilerParams(
            dimension_semantics=("parallel",),
            vmem_limit_bytes=32 * 1024 * 1024),
    )(state_fm, action_fm,
      kparams["w1s"], kparams["w1a"], kparams["w2"], kparams["w3"],
      kparams["b1"], kparams["b2"], kparams["b3"])


def dynamics_nn_forward(state, action, kparams, *, block_b=4096,
                        out_dtype=jnp.float32):
    """Batch-major convenience wrapper matching the PyTorch module signature.

    state: [B, S], action: [B, A] -> [B, S].  The two input transposes and the [S, B]
    output transpose are tiny XLA passes; callers that already hold feature-major data
    should call dynamics_nn_forward_fm directly (zero wrapper passes).
    """
    out_fm = dynamics_nn_forward_fm(state.T, action.T, kparams,
                                    block_b=block_b, out_dtype=out_dtype)
    return out_fm.T


def prepare_params(params, *, compute_dtype=jnp.bfloat16):
    """Call ONCE outside the hot loop.  Splits W1 for the concat-free fc1 and casts
    weights to the compute dtype (biases stay f32; accumulation is always f32)."""
    S, H = params["w3"].shape
    H2, in1 = params["w1"].shape
    assert H2 == H and params["w2"].shape == (H, H)
    A = in1 - S
    assert A > 0
    return {
        "w1s": params["w1"][:, :S].astype(compute_dtype),
        "w1a": params["w1"][:, S:].astype(compute_dtype),
        "w2": params["w2"].astype(compute_dtype),
        "w3": params["w3"].astype(compute_dtype),
        "b1": params["b1"].reshape(H, 1).astype(jnp.float32),
        "b2": params["b2"].reshape(H, 1).astype(jnp.float32),
        "b3": params["b3"].reshape(S, 1).astype(jnp.float32),
    }


def init_params(key, state_dim, action_dim, hidden_size):
    """torch.nn.Linear-style init; torch-native [out, in] weight layout."""
    in1 = state_dim + action_dim
    ks = jax.random.split(key, 6)

    def u(k, shape, fan_in):
        bound = fan_in ** -0.5
        return jax.random.uniform(k, shape, jnp.float32, -bound, bound)

    return {
        "w1": u(ks[0], (hidden_size, in1), in1),
        "b1": u(ks[1], (hidden_size,), in1),
        "w2": u(ks[2], (hidden_size, hidden_size), hidden_size),
        "b2": u(ks[3], (hidden_size,), hidden_size),
        "w3": u(ks[4], (state_dim, hidden_size), hidden_size),
        "b3": u(ks[5], (state_dim,), hidden_size),
    }


def reference_forward(state, action, params):
    x = jnp.concatenate([state, action], axis=-1)
    h1 = jax.nn.relu(x @ params["w1"].T + params["b1"])
    h2 = jax.nn.relu(h1 @ params["w2"].T + params["b2"])
    return h2 @ params["w3"].T + params["b3"]


if __name__ == "__main__":
    state_dim, action_dim, hidden_size = 4, 2, 32
    batch = 8

    key = jax.random.PRNGKey(0)
    k_params, k_state, k_action = jax.random.split(key, 3)

    params = init_params(k_params, state_dim, action_dim, hidden_size)
    state = jax.random.normal(k_state, (batch, state_dim), jnp.float32)
    action = jax.random.normal(k_action, (batch, action_dim), jnp.float32)

    ref = reference_forward(state, action, params)

    # f32 compute path: tight numerical check (batch-major wrapper).
    kp_f32 = prepare_params(params, compute_dtype=jnp.float32)
    out_f32 = jax.block_until_ready(dynamics_nn_forward(state, action, kp_f32))
    assert out_f32.shape == (batch, state_dim)
    assert jnp.allclose(out_f32, ref, atol=1e-5, rtol=1e-5)

    # Feature-major fast path (no wrapper passes): same numerics, transposed I/O.
    out_fm = jax.block_until_ready(
        dynamics_nn_forward_fm(state.T, action.T, kp_f32))
    assert out_fm.shape == (state_dim, batch)
    assert jnp.allclose(out_fm.T, ref, atol=1e-5, rtol=1e-5)

    # Default bf16 weights/activations (f32 accumulation): coarse sanity check.
    kp_bf16 = prepare_params(params, compute_dtype=jnp.bfloat16)
    out_bf16 = jax.block_until_ready(dynamics_nn_forward(state, action, kp_bf16))
    assert out_bf16.shape == (batch, state_dim)
    assert jnp.allclose(out_bf16, ref, atol=2e-1, rtol=2e-1)

    print("KERNEL_OK")
</pallas_src>

<mosaic_0001>
module attributes {stable_mosaic.version = 11 : i64} {
  func.func @dynamics_mlp_fm_kernel(%arg0: i32, %arg1: memref<4x8xf32, #tpu.memory_space<vmem>>, %arg2: memref<2x8xf32, #tpu.memory_space<vmem>>, %arg3: memref<32x4xf32, #tpu.memory_space<vmem>>, %arg4: memref<32x2xf32, #tpu.memory_space<vmem>>, %arg5: memref<32x32xf32, #tpu.memory_space<vmem>>, %arg6: memref<4x32xf32, #tpu.memory_space<vmem>>, %arg7: memref<32x1xf32, #tpu.memory_space<vmem>>, %arg8: memref<32x1xf32, #tpu.memory_space<vmem>>, %arg9: memref<4x1xf32, #tpu.memory_space<vmem>>, %arg10: memref<4x8xf32, #tpu.memory_space<vmem>>) attributes {dimension_semantics = [#tpu.dimension_semantics<parallel>], iteration_bounds = array<i64: 1>, scalar_prefetch = 0 : i64, scratch_operands = 0 : i64, tpu.core_type = #tpu.core_type<tc>, window_params = [{transform_indices = @transform_0, window_bounds = array<i64: 4, 8>}, {transform_indices = @transform_1, window_bounds = array<i64: 2, 8>}, {pipeline_mode = #tpu.pipeline_mode<synchronous>, transform_indices = @transform_2, window_bounds = array<i64: 32, 4>}, {pipeline_mode = #tpu.pipeline_mode<synchronous>, transform_indices = @transform_3, window_bounds = array<i64: 32, 2>}, {pipeline_mode = #tpu.pipeline_mode<synchronous>, transform_indices = @transform_4, window_bounds = array<i64: 32, 32>}, {pipeline_mode = #tpu.pipeline_mode<synchronous>, transform_indices = @transform_5, window_bounds = array<i64: 4, 32>}, {pipeline_mode = #tpu.pipeline_mode<synchronous>, transform_indices = @transform_6, window_bounds = array<i64: 32, 1>}, {pipeline_mode = #tpu.pipeline_mode<synchronous>, transform_indices = @transform_7, window_bounds = array<i64: 32, 1>}, {pipeline_mode = #tpu.pipeline_mode<synchronous>, transform_indices = @transform_8, window_bounds = array<i64: 4, 1>}, {transform_indices = @transform_9, window_bounds = array<i64: 4, 8>}]} {
    %c0 = arith.constant 0 : index
    %c0_0 = arith.constant 0 : index
    %0 = vector.load %arg1[%c0, %c0_0] : memref<4x8xf32, #tpu.memory_space<vmem>>, vector<4x8xf32>
    %c0_1 = arith.constant 0 : index
    %c0_2 = arith.constant 0 : index
    %1 = vector.load %arg2[%c0_1, %c0_2] : memref<2x8xf32, #tpu.memory_space<vmem>>, vector<2x8xf32>
    %c0_3 = arith.constant 0 : index
    %c0_4 = arith.constant 0 : index
    %2 = vector.load %arg3[%c0_3, %c0_4] : memref<32x4xf32, #tpu.memory_space<vmem>>, vector<32x4xf32>
    %cst = arith.constant dense<0.000000e+00> : vector<32x8xf32>
    %3 = tpu.matmul %2, %0, %cst {dimension_numbers = #tpu.dot_dimension_numbers<[1], [0], [0], [1], [0, 0, 1, 1], [], []>} : vector<32x4xf32>, vector<4x8xf32>, vector<32x8xf32> -> vector<32x8xf32>
    %c0_5 = arith.constant 0 : index
    %c0_6 = arith.constant 0 : index
    %4 = vector.load %arg4[%c0_5, %c0_6] : memref<32x2xf32, #tpu.memory_space<vmem>>, vector<32x2xf32>
    %cst_7 = arith.constant dense<0.000000e+00> : vector<32x8xf32>
    %5 = tpu.matmul %4, %1, %cst_7 {dimension_numbers = #tpu.dot_dimension_numbers<[1], [0], [0], [1], [0, 0, 1, 1], [], []>} : vector<32x2xf32>, vector<2x8xf32>, vector<32x8xf32> -> vector<32x8xf32>
    %6 = arith.addf %3, %5 : vector<32x8xf32>
    %c0_8 = arith.constant 0 : index
    %c0_9 = arith.constant 0 : index
    %7 = vector.load %arg7[%c0_8, %c0_9] : memref<32x1xf32, #tpu.memory_space<vmem>>, vector<32x1xf32>
    %8 = vector.broadcast %7 : vector<32x1xf32> to vector<32x8xf32>
    %9 = arith.addf %6, %8 : vector<32x8xf32>
    %cst_10 = arith.constant 0.000000e+00 : f32
    %10 = vector.broadcast %cst_10 : f32 to vector<32x8xf32>
    %11 = arith.maximumf %9, %10 : vector<32x8xf32>
    %c0_11 = arith.constant 0 : index
    %c0_12 = arith.constant 0 : index
    %12 = vector.load %arg5[%c0_11, %c0_12] : memref<32x32xf32, #tpu.memory_space<vmem>>, vector<32x32xf32>
    %cst_13 = arith.constant dense<0.000000e+00> : vector<32x8xf32>
    %13 = tpu.matmul %12, %11, %cst_13 {dimension_numbers = #tpu.dot_dimension_numbers<[1], [0], [0], [1], [0, 0, 1, 1], [], []>} : vector<32x32xf32>, vector<32x8xf32>, vector<32x8xf32> -> vector<32x8xf32>
    %c0_14 = arith.constant 0 : index
    %c0_15 = arith.constant 0 : index
    %14 = vector.load %arg8[%c0_14, %c0_15] : memref<32x1xf32, #tpu.memory_space<vmem>>, vector<32x1xf32>
    %15 = vector.broadcast %14 : vector<32x1xf32> to vector<32x8xf32>
    %16 = arith.addf %13, %15 : vector<32x8xf32>
    %cst_16 = arith.constant 0.000000e+00 : f32
    %17 = vector.broadcast %cst_16 : f32 to vector<32x8xf32>
    %18 = arith.maximumf %16, %17 : vector<32x8xf32>
    %c0_17 = arith.constant 0 : index
    %c0_18 = arith.constant 0 : index
    %19 = vector.load %arg6[%c0_17, %c0_18] : memref<4x32xf32, #tpu.memory_space<vmem>>, vector<4x32xf32>
    %cst_19 = arith.constant dense<0.000000e+00> : vector<4x8xf32>
    %20 = tpu.matmul %19, %18, %cst_19 {dimension_numbers = #tpu.dot_dimension_numbers<[1], [0], [0], [1], [0, 0, 1, 1], [], []>} : vector<4x32xf32>, vector<32x8xf32>, vector<4x8xf32> -> vector<4x8xf32>
    %c0_20 = arith.constant 0 : index
    %c0_21 = arith.constant 0 : index
    %21 = vector.load %arg9[%c0_20, %c0_21] : memref<4x1xf32, #tpu.memory_space<vmem>>, vector<4x1xf32>
    %22 = vector.broadcast %21 : vector<4x1xf32> to vector<4x8xf32>
    %23 = arith.addf %20, %22 : vector<4x8xf32>
    %c0_22 = arith.constant 0 : index
    %c0_23 = arith.constant 0 : index
    %24 = vector.load %arg10[%c0_22, %c0_23] : memref<4x8xf32, #tpu.memory_space<vmem>>, vector<4x8xf32>
    tpu.vector_store %arg10[%c0_22, %c0_23], %23 {strides = array<i32>} : memref<4x8xf32, #tpu.memory_space<vmem>>, vector<4x8xf32>,
    return
  }
  func.func @transform_0(%arg0: i32) -> (i32, i32) {
    %c0_i32 = arith.constant 0 : i32
    %c0_i32_0 = arith.constant 0 : i32
    return %c0_i32, %arg0 : i32, i32
  }
  func.func @transform_1(%arg0: i32) -> (i32, i32) {
    %c0_i32 = arith.constant 0 : i32
    %c0_i32_0 = arith.constant 0 : i32
    return %c0_i32, %arg0 : i32, i32
  }
  func.func @transform_2(%arg0: i32) -> (i32, i32) {
    %c0_i32 = arith.constant 0 : i32
    %c0_i32_0 = arith.constant 0 : i32
    %c0_i32_1 = arith.constant 0 : i32
    return %c0_i32, %c0_i32_0 : i32, i32
  }
  func.func @transform_3(%arg0: i32) -> (i32, i32) {
    %c0_i32 = arith.constant 0 : i32
    %c0_i32_0 = arith.constant 0 : i32
    %c0_i32_1 = arith.constant 0 : i32
    return %c0_i32, %c0_i32_0 : i32, i32
  }
  func.func @transform_4(%arg0: i32) -> (i32, i32) {
    %c0_i32 = arith.constant 0 : i32
    %c0_i32_0 = arith.constant 0 : i32
    %c0_i32_1 = arith.constant 0 : i32
    return %c0_i32, %c0_i32_0 : i32, i32
  }
  func.func @transform_5(%arg0: i32) -> (i32, i32) {
    %c0_i32 = arith.constant 0 : i32
    %c0_i32_0 = arith.constant 0 : i32
    %c0_i32_1 = arith.constant 0 : i32
    return %c0_i32, %c0_i32_0 : i32, i32
  }
  func.func @transform_6(%arg0: i32) -> (i32, i32) {
    %c0_i32 = arith.constant 0 : i32
    %c0_i32_0 = arith.constant 0 : i32
    %c0_i32_1 = arith.constant 0 : i32
    return %c0_i32, %c0_i32_0 : i32, i32
  }
  func.func @transform_7(%arg0: i32) -> (i32, i32) {
    %c0_i32 = arith.constant 0 : i32
    %c0_i32_0 = arith.constant 0 : i32
    %c0_i32_1 = arith.constant 0 : i32
    return %c0_i32, %c0_i32_0 : i32, i32
  }
  func.func @transform_8(%arg0: i32) -> (i32, i32) {
    %c0_i32 = arith.constant 0 : i32
    %c0_i32_0 = arith.constant 0 : i32
    %c0_i32_1 = arith.constant 0 : i32
    return %c0_i32, %c0_i32_0 : i32, i32
  }
  func.func @transform_9(%arg0: i32) -> (i32, i32) {
    %c0_i32 = arith.constant 0 : i32
    %c0_i32_0 = arith.constant 0 : i32
    return %c0_i32, %arg0 : i32, i32
  }
}

</mosaic_0001>

<llo_original>
// kernel: tpu_custom_call.1
$region0: #{tpu_custom_call.1}
  #allocation0 [shape = 'u32[]', space=smem, size = 0x4, offset = 0x4, fixed_abs, tag = 'smem constant byte address 0x4 - core index']
  #allocation1 [shape = 'u32[144,128]{1,0:T(1,128)}', space=vmem, size = 0x12000, scoped, tag = 'internal scratch']
  %s0 = inlined_call_operand.vmem [shape: f32[4,8], index: 0, kind: input, shape index: {}]
  %s1 = inlined_call_operand.vmem [shape: f32[2,8], index: 1, kind: input, shape index: {}]
  %s2 = inlined_call_operand.vmem [shape: f32[32,4], index: 2, kind: input, shape index: {}]
  %s3 = inlined_call_operand.vmem [shape: f32[32,2], index: 3, kind: input, shape index: {}]
  %s4 = inlined_call_operand.vmem [shape: f32[32,32], index: 4, kind: input, shape index: {}]
  %s5 = inlined_call_operand.vmem [shape: f32[4,32], index: 5, kind: input, shape index: {}]
  %s6 = inlined_call_operand.vmem [shape: f32[32,1], index: 6, kind: input, shape index: {}]
  %s7 = inlined_call_operand.vmem [shape: f32[32,1], index: 7, kind: input, shape index: {}]
  %s8 = inlined_call_operand.vmem [shape: f32[4,1], index: 8, kind: input, shape index: {}]
  %s9 = inlined_call_operand.hbm [shape: f32[4,8], index: 9, kind: output, shape index: {}]
  %s10 = sld [smem:[#allocation0]]
  $region46: #{tpu_custom_call.1} parent=0
    _
  %s12 = ssub.s32 1, %s10
  %s13 = scalar_select 0, %s12, %s10
  $region1: #{tpu_custom_call.1} parent=0
    #allocation2 [shape = 'u8[2048]{0}', space=vmem, size = 0x800, scoped, tag = 'output window, operand 0, single buffered']
    #allocation3 [shape = 's32[1]{0}', space=sflag, size = 0x4, scoped, tag = 'scoped memory for tpu_custom_call.1']
    %14 = vsyncpa [#allocation3], 0
    // Predicated region
    $region2: #{tpu_custom_call.1} parent=1 // pred_check
      _
    $region3: #{tpu_custom_call.1} parent=1 // pred_check_branch
      %16 = sbr.rel (0) target = $region5
    $region4: #{tpu_custom_call.1} parent=1 // pred_region
      _
    $region5: #{tpu_custom_call.1} parent=1 // pred_fallthru
      _
    // Predicated region
    $region6: #{tpu_custom_call.1} parent=1 // pred_check
      _
    $region7: #{tpu_custom_call.1} parent=1 // pred_check_branch
      %18 = sbr.rel (0) target = $region9
    $region8: #{tpu_custom_call.1} parent=1 // pred_region
      _
    $region9: #{tpu_custom_call.1} parent=1 // pred_fallthru
      _
    // Predicated region
    $region10: #{tpu_custom_call.1} parent=1 // pred_check
      _
    $region11: #{tpu_custom_call.1} parent=1 // pred_check_branch
      %20 = sbr.rel (0) target = $region13
    $region12: #{tpu_custom_call.1} parent=1 // pred_region
      _
    $region13: #{tpu_custom_call.1} parent=1 // pred_fallthru
      _
    // Predicated region
    $region14: #{tpu_custom_call.1} parent=1 // pred_check
      _
    $region15: #{tpu_custom_call.1} parent=1 // pred_check_branch
      %22 = sbr.rel (0) target = $region17
    $region16: #{tpu_custom_call.1} parent=1 // pred_region
      _
    $region17: #{tpu_custom_call.1} parent=1 // pred_fallthru
      _
    // Predicated region
    $region18: #{tpu_custom_call.1} parent=1 // pred_check
      _
    $region19: #{tpu_custom_call.1} parent=1 // pred_check_branch
      %24 = sbr.rel (0) target = $region21
    $region20: #{tpu_custom_call.1} parent=1 // pred_region
      _
    $region21: #{tpu_custom_call.1} parent=1 // pred_fallthru
      _
    // Predicated region
    $region22: #{tpu_custom_call.1} parent=1 // pred_check
      _
    $region23: #{tpu_custom_call.1} parent=1 // pred_check_branch
      %26 = sbr.rel (0) target = $region25
    $region24: #{tpu_custom_call.1} parent=1 // pred_region
      _
    $region25: #{tpu_custom_call.1} parent=1 // pred_fallthru
      _
    // Predicated region
    $region26: #{tpu_custom_call.1} parent=1 // pred_check
      _
    $region27: #{tpu_custom_call.1} parent=1 // pred_check_branch
      %28 = sbr.rel (0) target = $region29
    $region28: #{tpu_custom_call.1} parent=1 // pred_region
      _
    $region29: #{tpu_custom_call.1} parent=1 // pred_fallthru
      _
    // Predicated region
    $region30: #{tpu_custom_call.1} parent=1 // pred_check
      _
    $region31: #{tpu_custom_call.1} parent=1 // pred_check_branch
      %30 = sbr.rel (0) target = $region33
    $region32: #{tpu_custom_call.1} parent=1 // pred_region
      _
    $region33: #{tpu_custom_call.1} parent=1 // pred_fallthru
      _
    // Predicated region
    $region34: #{tpu_custom_call.1} parent=1 // pred_check
      _
    $region35: #{tpu_custom_call.1} parent=1 // pred_check_branch
      %32 = sbr.rel (0) target = $region37
    $region36: #{tpu_custom_call.1} parent=1 // pred_region
      _
    $region37: #{tpu_custom_call.1} parent=1 // pred_fallthru
      _
    %v33 = vld [vmem:[%s0] sm:$0xf]
    %v34 = vld [vmem:[%s1] sm:$0x3]
    %v35 = vld [vmem:[%s2] sm:$0xff]
    %v36 = vld [vmem:[%s2 + $0x8] sm:$0xff]
    %v37 = vld [vmem:[%s2 + $0x10] sm:$0xff]
    %v38 = vld [vmem:[%s2 + $0x18] sm:$0xff]
    %v39 = vld [vmem:[%s3] sm:$0xff]
    %v40 = vld [vmem:[%s3 + $0x8] sm:$0xff]
    %v41 = vld [vmem:[%s3 + $0x10] sm:$0xff]
    %v42 = vld [vmem:[%s3 + $0x18] sm:$0xff]
    %vm43 = vcmask 15360
    %v45 = vsel %vm43, %v39, 0
    %v48 = vsel %vm43, %v40, 0
    %v51 = vsel %vm43, %v41, 0
    %v54 = vsel %vm43, %v42, 0
    %vm56 = vcmask 1041408
    %v58 = vsel %vm56, %v34, 0
    %60 = vmatprep.subr.mxu0 0.0
    %61 = vmatpush1.msra.mxu0 %v58
    %62 = vmatprep.subr.mxu0 0.0
    %63 = vmatpush1.msra.mxu0 0.0
    %64 = vmatprep.subr.mxu0 0.0
    %65 = vmatpush1.msra.mxu0 0.0
    %66 = vmatprep.subr.mxu0 0.0
    %67 = vmatpush1.msra.mxu0 0.0
    %68 = vmatprep.subr.mxu0 0.0
    %69 = vmatpush1.msra.mxu0 0.0
    %70 = vmatprep.subr.mxu0 0.0
    %71 = vmatpush1.msra.mxu0 0.0
    %72 = vmatprep.subr.mxu0 0.0
    %73 = vmatpush1.msra.mxu0 0.0
    %74 = vmatprep.subr.mxu0 0.0
    %75 = vmatpush1.msra.mxu0 0.0
    %76 = vmatprep.subr.mxu0 0.0
    %77 = vmatpush1.msra.mxu0 0.0
    %78 = vmatprep.subr.mxu0 0.0
    %79 = vmatpush1.msra.mxu0 0.0
    %80 = vmatprep.subr.mxu0 0.0
    %81 = vmatpush1.msra.mxu0 0.0
    %82 = vmatprep.subr.mxu0 0.0
    %83 = vmatpush1.msra.mxu0 0.0
    %84 = vmatprep.subr.mxu0 0.0
    %85 = vmatpush1.msra.mxu0 0.0
    %86 = vmatprep.subr.mxu0 0.0
    %87 = vmatpush1.msra.mxu0 0.0
    %88 = vmatprep.subr.mxu0 0.0
    %89 = vmatpush1.msra.mxu0 0.0
    %90 = vmatprep.subr.mxu0 0.0
    %91 = vmatpush1.msra.mxu0 0.0
    %92 = vmatprep.subr.mxu0 0.0
    %93 = vmatpush1.msra.mxu0 0.0
    %94 = vmatprep.subr.mxu0 0.0
    %95 = vmatpush1.msra.mxu0 0.0
    %96 = vmatprep.subr.mxu0 0.0
    %97 = vmatpush1.msra.mxu0 0.0
    %98 = vmatprep.subr.mxu0 0.0
    %99 = vmatpush1.msra.mxu0 0.0
    %100 = vmatprep.subr.mxu0 0.0
    %101 = vmatpush1.msra.mxu0 0.0
    %102 = vmatprep.subr.mxu0 0.0
    %103 = vmatpush1.msra.mxu0 0.0
    %104 = vmatprep.subr.mxu0 0.0
    %105 = vmatpush1.msra.mxu0 0.0
    %106 = vmatprep.subr.mxu0 0.0
    %107 = vmatpush1.msra.mxu0 0.0
    %108 = vmatprep.subr.mxu0 0.0
    %109 = vmatpush1.msra.mxu0 0.0
    %110 = vmatprep.subr.mxu0 0.0
    %111 = vmatpush1.msra.mxu0 0.0
    %112 = vmatprep.subr.mxu0 0.0
    %113 = vmatpush1.msra.mxu0 0.0
    %114 = vmatprep.subr.mxu0 0.0
    %115 = vmatpush1.msra.mxu0 0.0
    %116 = vmatprep.subr.mxu0 0.0
    %117 = vmatpush1.msra.mxu0 0.0
    %118 = vmatprep.subr.mxu0 0.0
    %119 = vmatpush1.msra.mxu0 0.0
    %120 = vmatprep.subr.mxu0 0.0
    %121 = vmatpush1.msra.mxu0 0.0
    %122 = vmatprep.subr.mxu0 0.0
    %123 = vmatpush1.msra.mxu0 0.0
    %124 = vmatprep.mubr.f32.mxu0 0.0
    %125 = vmatmul.mubr.f32.gmra.mrb[0].mxu0 %v45
    %v126 = vpop.f32.mrb[0].mxu0
    %v127 = vadd.f32 0.0, %v126
    %v128 = vpop.f32.mrb[0].mxu0
    %129 = vmatprep.mubr.f32.mxu0 0.0
    %130 = vmatmul.mubr.f32.gmra.mrb[0].mxu0 %v48
    %v131 = vpop.f32.mrb[0].mxu0
    %v132 = vadd.f32 0.0, %v131
    %v133 = vpop.f32.mrb[0].mxu0
    %134 = vmatprep.mubr.f32.mxu0 0.0
    %135 = vmatmul.mubr.f32.gmra.mrb[0].mxu0 %v51
    %v136 = vpop.f32.mrb[0].mxu0
    %v137 = vadd.f32 0.0, %v136
    %v138 = vpop.f32.mrb[0].mxu0
    %139 = vmatprep.mubr.f32.mxu0 0.0
    %140 = vmatmul.mubr.f32.gmra.mrb[0].mxu0 %v54
    %v141 = vpop.f32.mrb[0].mxu0
    %v142 = vadd.f32 0.0, %v141
    %v143 = vpop.f32.mrb[0].mxu0
    %144 = vdwg.mxu0
    %vm145 = vcmask 31744
    %v147 = vsel %vm145, %v35, 0
    %v150 = vsel %vm145, %v36, 0
    %v153 = vsel %vm145, %v37, 0
    %v156 = vsel %vm145, %v38, 0
    %vm158 = vcmask 1043456
    %v160 = vsel %vm158, %v33, 0
    %162 = vmatprep.subr.mxu0 0.0
    %163 = vmatpush1.msra.mxu0 %v160
    %164 = vmatprep.subr.mxu0 0.0
    %165 = vmatpush1.msra.mxu0 0.0
    %166 = vmatprep.subr.mxu0 0.0
    %167 = vmatpush1.msra.mxu0 0.0
    %168 = vmatprep.subr.mxu0 0.0
    %169 = vmatpush1.msra.mxu0 0.0
    %170 = vmatprep.subr.mxu0 0.0
    %171 = vmatpush1.msra.mxu0 0.0
    %172 = vmatprep.subr.mxu0 0.0
    %173 = vmatpush1.msra.mxu0 0.0
    %174 = vmatprep.subr.mxu0 0.0
    %175 = vmatpush1.msra.mxu0 0.0
    %176 = vmatprep.subr.mxu0 0.0
    %177 = vmatpush1.msra.mxu0 0.0
    %178 = vmatprep.subr.mxu0 0.0
    %179 = vmatpush1.msra.mxu0 0.0
    %180 = vmatprep.subr.mxu0 0.0
    %181 = vmatpush1.msra.mxu0 0.0
    %182 = vmatprep.subr.mxu0 0.0
    %183 = vmatpush1.msra.mxu0 0.0
    %184 = vmatprep.subr.mxu0 0.0
    %185 = vmatpush1.msra.mxu0 0.0
    %186 = vmatprep.subr.mxu0 0.0
    %187 = vmatpush1.msra.mxu0 0.0
    %188 = vmatprep.subr.mxu0 0.0
    %189 = vmatpush1.msra.mxu0 0.0
    %190 = vmatprep.subr.mxu0 0.0
    %191 = vmatpush1.msra.mxu0 0.0
    %192 = vmatprep.subr.mxu0 0.0
    %193 = vmatpush1.msra.mxu0 0.0
    %194 = vmatprep.subr.mxu0 0.0
    %195 = vmatpush1.msra.mxu0 0.0
    %196 = vmatprep.subr.mxu0 0.0
    %197 = vmatpush1.msra.mxu0 0.0
    %198 = vmatprep.subr.mxu0 0.0
    %199 = vmatpush1.msra.mxu0 0.0
    %200 = vmatprep.subr.mxu0 0.0
    %201 = vmatpush1.msra.mxu0 0.0
    %202 = vmatprep.subr.mxu0 0.0
    %203 = vmatpush1.msra.mxu0 0.0
    %204 = vmatprep.subr.mxu0 0.0
    %205 = vmatpush1.msra.mxu0 0.0
    %206 = vmatprep.subr.mxu0 0.0
    %207 = vmatpush1.msra.mxu0 0.0
    %208 = vmatprep.subr.mxu0 0.0
    %209 = vmatpush1.msra.mxu0 0.0
    %210 = vmatprep.subr.mxu0 0.0
    %211 = vmatpush1.msra.mxu0 0.0
    %212 = vmatprep.subr.mxu0 0.0
    %213 = vmatpush1.msra.mxu0 0.0
    %214 = vmatprep.subr.mxu0 0.0
    %215 = vmatpush1.msra.mxu0 0.0
    %216 = vmatprep.subr.mxu0 0.0
    %217 = vmatpush1.msra.mxu0 0.0
    %218 = vmatprep.subr.mxu0 0.0
    %219 = vmatpush1.msra.mxu0 0.0
    %220 = vmatprep.subr.mxu0 0.0
    %221 = vmatpush1.msra.mxu0 0.0
    %222 = vmatprep.subr.mxu0 0.0
    %223 = vmatpush1.msra.mxu0 0.0
    %224 = vmatprep.subr.mxu0 0.0
    %225 = vmatpush1.msra.mxu0 0.0
    %226 = vmatprep.mubr.f32.mxu0 0.0
    %227 = vmatmul.mubr.f32.gmra.mrb[0].mxu0 %v147
    %v228 = vpop.f32.mrb[0].mxu0
    %v229 = vadd.f32 %v127, %v228
    %v230 = vpop.f32.mrb[0].mxu0
    %231 = vmatprep.mubr.f32.mxu0 0.0
    %232 = vmatmul.mubr.f32.gmra.mrb[0].mxu0 %v150
    %v233 = vpop.f32.mrb[0].mxu0
    %v234 = vadd.f32 %v132, %v233
    %v235 = vpop.f32.mrb[0].mxu0
    %236 = vmatprep.mubr.f32.mxu0 0.0
    %237 = vmatmul.mubr.f32.gmra.mrb[0].mxu0 %v153
    %v238 = vpop.f32.mrb[0].mxu0
    %v239 = vadd.f32 %v137, %v238
    %v240 = vpop.f32.mrb[0].mxu0
    %241 = vmatprep.mubr.f32.mxu0 0.0
    %242 = vmatmul.mubr.f32.gmra.mrb[0].mxu0 %v156
    %v243 = vpop.f32.mrb[0].mxu0
    %v244 = vadd.f32 %v142, %v243
    %v245 = vpop.f32.mrb[0].mxu0
    %246 = vdwg.mxu0
    %v247 = vld [vmem:[%s6] sm:$0xff]
    %v248 = vld [vmem:[%s6 + $0x8] sm:$0xff]
    %v249 = vld [vmem:[%s6 + $0x10] sm:$0xff]
    %v250 = vld [vmem:[%s6 + $0x18] sm:$0xff]
    %252 = vset.pattern.permute.xlu0 0
    %253 = vperm.xlu0 %252, %v247
    %v254 = vpop.permute.xlu0 %253
    %257 = vset.pattern.permute.xlu0 0
    %258 = vperm.xlu0 %257, %v248
    %v259 = vpop.permute.xlu0 %258
    %262 = vset.pattern.permute.xlu0 0
    %263 = vperm.xlu0 %262, %v249
    %v264 = vpop.permute.xlu0 %263
    %267 = vset.pattern.permute.xlu0 0
    %268 = vperm.xlu0 %267, %v250
    %v269 = vpop.permute.xlu0 %268
    %v271 = vadd.f32 %v229, %v254
    %v272 = vadd.f32 %v234, %v259
    %v273 = vadd.f32 %v239, %v264
    %v274 = vadd.f32 %v244, %v269
    %v275 = vmax.f32 %v271, 0.0
    %v276 = vmax.f32 %v272, 0.0
    %v277 = vmax.f32 %v273, 0.0
    %v278 = vmax.f32 %v274, 0.0
    %v279 = vld [vmem:[%s4] sm:$0xff]
    %v280 = vld [vmem:[%s4 + $0x8] sm:$0xff]
    %v281 = vld [vmem:[%s4 + $0x10] sm:$0xff]
    %v282 = vld [vmem:[%s4 + $0x18] sm:$0xff]
    %v283 = vld [vmem:[%s7] sm:$0xff]
    %v284 = vld [vmem:[%s7 + $0x8] sm:$0xff]
    %v285 = vld [vmem:[%s7 + $0x10] sm:$0xff]
    %v286 = vld [vmem:[%s7 + $0x18] sm:$0xff]
    %288 = vset.pattern.permute.xlu0 0
    %289 = vperm.xlu0 %288, %v283
    %v290 = vpop.permute.xlu0 %289
    %293 = vset.pattern.permute.xlu0 0
    %294 = vperm.xlu0 %293, %v284
    %v295 = vpop.permute.xlu0 %294
    %298 = vset.pattern.permute.xlu0 0
    %299 = vperm.xlu0 %298, %v285
    %v300 = vpop.permute.xlu0 %299
    %303 = vset.pattern.permute.xlu0 0
    %304 = vperm.xlu0 %303, %v286
    %v305 = vpop.permute.xlu0 %304
    %vm307 = vcmask 261120
    %v309 = vsel %vm307, %v279, 0
    %v312 = vsel %vm307, %v280, 0
    %v315 = vsel %vm307, %v281, 0
    %v318 = vsel %vm307, %v282, 0
    %320 = vmatprep.subr.mxu0 0.0
    %321 = vmatpush1.msra.mxu0 %v275
    %322 = vmatprep.subr.mxu0 0.0
    %323 = vmatpush1.msra.mxu0 %v276
    %324 = vmatprep.subr.mxu0 0.0
    %325 = vmatpush1.msra.mxu0 %v277
    %326 = vmatprep.subr.mxu0 0.0
    %327 = vmatpush1.msra.mxu0 %v278
    %328 = vmatprep.subr.mxu0 0.0
    %329 = vmatpush1.msra.mxu0 0.0
    %330 = vmatprep.subr.mxu0 0.0
    %331 = vmatpush1.msra.mxu0 0.0
    %332 = vmatprep.subr.mxu0 0.0
    %333 = vmatpush1.msra.mxu0 0.0
    %334 = vmatprep.subr.mxu0 0.0
    %335 = vmatpush1.msra.mxu0 0.0
    %336 = vmatprep.subr.mxu0 0.0
    %337 = vmatpush1.msra.mxu0 0.0
    %338 = vmatprep.subr.mxu0 0.0
    %339 = vmatpush1.msra.mxu0 0.0
    %340 = vmatprep.subr.mxu0 0.0
    %341 = vmatpush1.msra.mxu0 0.0
    %342 = vmatprep.subr.mxu0 0.0
    %343 = vmatpush1.msra.mxu0 0.0
    %344 = vmatprep.subr.mxu0 0.0
    %345 = vmatpush1.msra.mxu0 0.0
    %346 = vmatprep.subr.mxu0 0.0
    %347 = vmatpush1.msra.mxu0 0.0
    %348 = vmatprep.subr.mxu0 0.0
    %349 = vmatpush1.msra.mxu0 0.0
    %350 = vmatprep.subr.mxu0 0.0
    %351 = vmatpush1.msra.mxu0 0.0
    %352 = vmatprep.subr.mxu0 0.0
    %353 = vmatpush1.msra.mxu0 0.0
    %354 = vmatprep.subr.mxu0 0.0
    %355 = vmatpush1.msra.mxu0 0.0
    %356 = vmatprep.subr.mxu0 0.0
    %357 = vmatpush1.msra.mxu0 0.0
    %358 = vmatprep.subr.mxu0 0.0
    %359 = vmatpush1.msra.mxu0 0.0
    %360 = vmatprep.subr.mxu0 0.0
    %361 = vmatpush1.msra.mxu0 0.0
    %362 = vmatprep.subr.mxu0 0.0
    %363 = vmatpush1.msra.mxu0 0.0
    %364 = vmatprep.subr.mxu0 0.0
    %365 = vmatpush1.msra.mxu0 0.0
    %366 = vmatprep.subr.mxu0 0.0
    %367 = vmatpush1.msra.mxu0 0.0
    %368 = vmatprep.subr.mxu0 0.0
    %369 = vmatpush1.msra.mxu0 0.0
    %370 = vmatprep.subr.mxu0 0.0
    %371 = vmatpush1.msra.mxu0 0.0
    %372 = vmatprep.subr.mxu0 0.0
    %373 = vmatpush1.msra.mxu0 0.0
    %374 = vmatprep.subr.mxu0 0.0
    %375 = vmatpush1.msra.mxu0 0.0
    %376 = vmatprep.subr.mxu0 0.0
    %377 = vmatpush1.msra.mxu0 0.0
    %378 = vmatprep.subr.mxu0 0.0
    %379 = vmatpush1.msra.mxu0 0.0
    %380 = vmatprep.subr.mxu0 0.0
    %381 = vmatpush1.msra.mxu0 0.0
    %382 = vmatprep.subr.mxu0 0.0
    %383 = vmatpush1.msra.mxu0 0.0
    %384 = vmatprep.mubr.f32.mxu0 0.0
    %385 = vmatmul.mubr.f32.gmra.mrb[0].mxu0 %v309
    %v386 = vpop.f32.mrb[0].mxu0
    %v387 = vadd.f32 %v290, %v386
    %v388 = vpop.f32.mrb[0].mxu0
    %389 = vmatprep.mubr.f32.mxu0 0.0
    %390 = vmatmul.mubr.f32.gmra.mrb[0].mxu0 %v312
    %v391 = vpop.f32.mrb[0].mxu0
    %v392 = vadd.f32 %v295, %v391
    %v393 = vpop.f32.mrb[0].mxu0
    %394 = vmatprep.mubr.f32.mxu0 0.0
    %395 = vmatmul.mubr.f32.gmra.mrb[0].mxu0 %v315
    %v396 = vpop.f32.mrb[0].mxu0
    %v397 = vadd.f32 %v300, %v396
    %v398 = vpop.f32.mrb[0].mxu0
    %399 = vmatprep.mubr.f32.mxu0 0.0
    %400 = vmatmul.mubr.f32.gmra.mrb[0].mxu0 %v318
    %v401 = vpop.f32.mrb[0].mxu0
    %v402 = vadd.f32 %v305, %v401
    %v403 = vpop.f32.mrb[0].mxu0
    %404 = vdwg.mxu0
    %v405 = vmax.f32 %v387, 0.0
    %v406 = vmax.f32 %v392, 0.0
    %v407 = vmax.f32 %v397, 0.0
    %v408 = vmax.f32 %v402, 0.0
    %v409 = vld [vmem:[%s5] sm:$0xf]
    %v410 = vld [vmem:[%s8] sm:$0xf]
    %412 = vset.pattern.permute.xlu0 0
    %413 = vperm.xlu0 %412, %v410
    %v414 = vpop.permute.xlu0 %413
    %v417 = vsel %vm307, %v409, 0
    %419 = vmatprep.subr.mxu0 0.0
    %420 = vmatpush1.msra.mxu0 %v405
    %421 = vmatprep.subr.mxu0 0.0
    %422 = vmatpush1.msra.mxu0 %v406
    %423 = vmatprep.subr.mxu0 0.0
    %424 = vmatpush1.msra.mxu0 %v407
    %425 = vmatprep.subr.mxu0 0.0
    %426 = vmatpush1.msra.mxu0 %v408
    %427 = vmatprep.subr.mxu0 0.0
    %428 = vmatpush1.msra.mxu0 0.0
    %429 = vmatprep.subr.mxu0 0.0
    %430 = vmatpush1.msra.mxu0 0.0
    %431 = vmatprep.subr.mxu0 0.0
    %432 = vmatpush1.msra.mxu0 0.0
    %433 = vmatprep.subr.mxu0 0.0
    %434 = vmatpush1.msra.mxu0 0.0
    %435 = vmatprep.subr.mxu0 0.0
    %436 = vmatpush1.msra.mxu0 0.0
    %437 = vmatprep.subr.mxu0 0.0
    %438 = vmatpush1.msra.mxu0 0.0
    %439 = vmatprep.subr.mxu0 0.0
    %440 = vmatpush1.msra.mxu0 0.0
    %441 = vmatprep.subr.mxu0 0.0
    %442 = vmatpush1.msra.mxu0 0.0
    %443 = vmatprep.subr.mxu0 0.0
    %444 = vmatpush1.msra.mxu0 0.0
    %445 = vmatprep.subr.mxu0 0.0
    %446 = vmatpush1.msra.mxu0 0.0
    %447 = vmatprep.subr.mxu0 0.0
    %448 = vmatpush1.msra.mxu0 0.0
    %449 = vmatprep.subr.mxu0 0.0
    %450 = vmatpush1.msra.mxu0 0.0
    %451 = vmatprep.subr.mxu0 0.0
    %452 = vmatpush1.msra.mxu0 0.0
    %453 = vmatprep.subr.mxu0 0.0
    %454 = vmatpush1.msra.mxu0 0.0
    %455 = vmatprep.subr.mxu0 0.0
    %456 = vmatpush1.msra.mxu0 0.0
    %457 = vmatprep.subr.mxu0 0.0
    %458 = vmatpush1.msra.mxu0 0.0
    %459 = vmatprep.subr.mxu0 0.0
    %460 = vmatpush1.msra.mxu0 0.0
    %461 = vmatprep.subr.mxu0 0.0
    %462 = vmatpush1.msra.mxu0 0.0
    %463 = vmatprep.subr.mxu0 0.0
    %464 = vmatpush1.msra.mxu0 0.0
    %465 = vmatprep.subr.mxu0 0.0
    %466 = vmatpush1.msra.mxu0 0.0
    %467 = vmatprep.subr.mxu0 0.0
    %468 = vmatpush1.msra.mxu0 0.0
    %469 = vmatprep.subr.mxu0 0.0
    %470 = vmatpush1.msra.mxu0 0.0
    %471 = vmatprep.subr.mxu0 0.0
    %472 = vmatpush1.msra.mxu0 0.0
    %473 = vmatprep.subr.mxu0 0.0
    %474 = vmatpush1.msra.mxu0 0.0
    %475 = vmatprep.subr.mxu0 0.0
    %476 = vmatpush1.msra.mxu0 0.0
    %477 = vmatprep.subr.mxu0 0.0
    %478 = vmatpush1.msra.mxu0 0.0
    %479 = vmatprep.subr.mxu0 0.0
    %480 = vmatpush1.msra.mxu0 0.0
    %481 = vmatprep.subr.mxu0 0.0
    %482 = vmatpush1.msra.mxu0 0.0
    %483 = vmatprep.mubr.f32.mxu0 0.0
    %484 = vmatmul.mubr.f32.gmra.mrb[0].mxu0 %v417
    %v485 = vpop.f32.mrb[0].mxu0
    %v486 = vadd.f32 %v414, %v485
    %v487 = vpop.f32.mrb[0].mxu0
    %488 = vdwg.mxu0
    %vm489 = vcmask 60416
    %490 = vst.msk [vmem:[#allocation2] sm:$0xf] %vm489, %v486
    // Predicated region
    $region38: #{tpu_custom_call.1} parent=1 // pred_check
      _
    $region39: #{tpu_custom_call.1} parent=1 // pred_check_branch
      %492 = sbr.rel (0) target = $region41
    $region40: #{tpu_custom_call.1} parent=1 // pred_region
      %s494 = ssub.s32 64, 64
      %495 = vsyncadd [#allocation3], %s494
      %s497 = sshll.u32 [#allocation2], 4
      %s498 = int_to_ptr.vmem [resolvable:$true] %s497
      %500 = dma.vmem_to_hbm [thread:$0]  %s498, 64, %s9, [#allocation3]
    $region41: #{tpu_custom_call.1} parent=1 // pred_fallthru
      _
    // Predicated region
    $region42: #{tpu_custom_call.1} parent=1 // pred_check
      _
    $region43: #{tpu_custom_call.1} parent=1 // pred_check_branch
      %502 = sbr.rel (0) target = $region45
    $region44: #{tpu_custom_call.1} parent=1 // pred_region
      %503 = dma.done [#allocation3], 64
    $region45: #{tpu_custom_call.1} parent=1 // pred_fallthru
      _
    %504 = vsyncpa [#allocation3], 1

</llo_original>
